<compile_context>
chip_gen: v7x
topology: tpu7x:2x2x1
jax: 0.10.0
libtpu: 0.0.40
codegen_flags: <defaults>
</compile_context>

<pallas_src>
import jax
import jax.numpy as jnp
from jax.experimental import pallas as pl
from jax.experimental.pallas import tpu as pltpu


# ----------------------------------------------------------------------------
# Fused Pallas kernel: the entire TGCN cell in one call.
# ----------------------------------------------------------------------------
def _tgcn_cell_fused_kernel(lap_ref, sel_ref, x_ref, h_ref,
                            w1x_ref, w1h_ref, b1_ref,
                            w2x_ref, w2h_ref, b2_ref, out_ref):
    """All refs live in VMEM.

    lap : (B*N, B*N) block-diagonal normalized Laplacian  kron(I_B, L)
    sel : (4, B*N, B*N) constant 0/1 selector matrices [sr_lo, sr_hi, su_lo, su_hi]
    x   : (B*N, C)  inputs, batch folded into rows
    h   : (B*N, H)  hidden state, batch folded into rows
    w1x : (C, 2H)  w1h : (H, 2H)  b1 : (1, 2H)     (graph_conv1, split weights)
    w2x : (C, H)   w2h : (H, H)   b2 : (1, H)      (graph_conv2, split weights)
    out : (B*N, H)  new hidden state
    """
    f32 = jnp.float32
    lap = lap_ref[...]
    h = h_ref[...]
    H = h.shape[-1]

    # ---- graph conv 1: sigmoid(L @ [x|h] @ W1 + b1), split-weight, batch in rows
    lx = jnp.dot(lap, x_ref[...], preferred_element_type=f32)          # (BN, C)
    lh = jnp.dot(lap, h, preferred_element_type=f32)                   # (BN, H)
    conc = jax.nn.sigmoid(
        jnp.dot(lx, w1x_ref[...], preferred_element_type=f32)
        + jnp.dot(lh, w1h_ref[...], preferred_element_type=f32)
        + b1_ref[...])                                                 # (BN, 2H)

    # ---- r/u = torch.chunk of the per-batch node-major flat (N*2H) vector,
    #      realized as exact 0/1 permutation matmuls (no in-kernel reshapes).
    cl = conc[:, :H]                                                   # (BN, H)
    ch = conc[:, H:]                                                   # (BN, H)
    r = (jnp.dot(sel_ref[0], cl, preferred_element_type=f32)
         + jnp.dot(sel_ref[1], ch, preferred_element_type=f32))        # (BN, H)
    u = (jnp.dot(sel_ref[2], cl, preferred_element_type=f32)
         + jnp.dot(sel_ref[3], ch, preferred_element_type=f32))        # (BN, H)

    # ---- graph conv 2: tanh(L @ [x | r*h] @ W2 + b2); L@x is reused.
    lrh = jnp.dot(lap, r * h, preferred_element_type=f32)              # (BN, H)
    c = jnp.tanh(
        jnp.dot(lx, w2x_ref[...], preferred_element_type=f32)
        + jnp.dot(lrh, w2h_ref[...], preferred_element_type=f32)
        + b2_ref[...])                                                 # (BN, H)

    # ---- fused GRU gate: new_h = u*h + (1-u)*c  (single small HBM writeback)
    out_ref[...] = u * h + (1.0 - u) * c


def tgcn_cell(params, inputs, hidden_state):
    """inputs: (B, N, 2), hidden_state: (B, N*H). Returns (new_h, new_h)."""
    B, N, C = inputs.shape
    H = params["hidden_dim"]
    BN = B * N
    assert params["lap_blk"].shape[0] == BN, "params built for a different batch size"

    x_rows = inputs.reshape(BN, C)          # free, contiguous reshape
    h_rows = hidden_state.reshape(BN, H)    # free, contiguous reshape

    vmem = pl.BlockSpec(memory_space=pltpu.MemorySpace.VMEM)
    new_h_rows = pl.pallas_call(
        _tgcn_cell_fused_kernel,
        out_shape=jax.ShapeDtypeStruct((BN, H), jnp.float32),
        in_specs=[vmem] * 10,
        out_specs=vmem,
        compiler_params=pltpu.CompilerParams(vmem_limit_bytes=32 * 1024 * 1024),
    )(params["lap_blk"], params["sel_blk"], x_rows, h_rows,
      params["w1x"], params["w1h"], params["b1"],
      params["w2x"], params["w2h"], params["b2"])

    new_h = new_h_rows.reshape(B, N * H)    # free, contiguous reshape
    return new_h, new_h


# ----------------------------------------------------------------------------
# Parameter / constant setup (plain JAX, done once per model & batch size)
# ----------------------------------------------------------------------------
def calculate_laplacian_with_self_loop(adj):
    m = adj + jnp.eye(adj.shape[0], dtype=adj.dtype)
    row_sum = m.sum(axis=1)
    d_inv_sqrt = jnp.power(row_sum, -0.5)
    d_inv_sqrt = jnp.where(jnp.isinf(d_inv_sqrt), 0.0, d_inv_sqrt)
    d_mat_inv_sqrt = jnp.diag(d_inv_sqrt)
    return (m @ d_mat_inv_sqrt).T @ d_mat_inv_sqrt


def _chunk_selectors(N, m_idx):
    """0/1 matrices (lo, hi) s.t. lo@conc[:, :H] + hi@conc[:, H:] reproduces the
    node-major flat chunk quirk: out[n, k] = conc[m//2, (m%2)*H + k], m = m_idx[n]."""
    p = jnp.arange(N)
    rows = (m_idx // 2)[:, None]
    par = (m_idx % 2)[:, None]
    lo = ((p[None, :] == rows) & (par == 0)).astype(jnp.float32)
    hi = ((p[None, :] == rows) & (par == 1)).astype(jnp.float32)
    return lo, hi


def init_params(key, adj, input_dim, hidden_dim, batch_size):
    # TGCNGraphConvolution weights are (num_gru_units + 2, output_dim); the
    # PyTorch forward only works when the input feature dim is 2.
    assert input_dim == 2, "TGCNGraphConvolution weight shape implies input_dim == 2"
    N = adj.shape[0]
    H = hidden_dim
    B = batch_size

    def xavier_uniform(k, fan_in, fan_out):
        bound = (6.0 / (fan_in + fan_out)) ** 0.5
        return jax.random.uniform(k, (fan_in, fan_out), jnp.float32, -bound, bound)

    k1, k2 = jax.random.split(key)
    w1 = xavier_uniform(k1, H + 2, 2 * H)
    w2 = xavier_uniform(k2, H + 2, H)
    b1 = jnp.full((1, 2 * H), 1.0, jnp.float32)   # graph_conv1 bias = 1.0
    b2 = jnp.zeros((1, H), jnp.float32)           # graph_conv2 bias = 0.0

    lap = calculate_laplacian_with_self_loop(adj)
    eye_b = jnp.eye(B, dtype=jnp.float32)

    n_idx = jnp.arange(N)
    sr_lo, sr_hi = _chunk_selectors(N, n_idx)       # r = first N*H flat elements
    su_lo, su_hi = _chunk_selectors(N, N + n_idx)   # u = last  N*H flat elements
    sel_blk = jnp.stack([jnp.kron(eye_b, s) for s in (sr_lo, sr_hi, su_lo, su_hi)])

    return dict(
        hidden_dim=H,
        laplacian=lap,
        lap_blk=jnp.kron(eye_b, lap),               # (B*N, B*N) block-diag Laplacian
        sel_blk=sel_blk,                            # (4, B*N, B*N)
        w1=w1, w2=w2,                               # full weights (for the reference)
        w1x=w1[:2, :], w1h=w1[2:, :], b1=b1,
        w2x=w2[:2, :], w2h=w2[2:, :], b2=b2,
    )


# ----------------------------------------------------------------------------
# Pure-JAX reference (mirrors the PyTorch forward exactly) for verification
# ----------------------------------------------------------------------------
def tgcn_cell_ref(params, inputs, hidden_state):
    B, N, _ = inputs.shape
    H = params["hidden_dim"]
    lap = params["laplacian"]

    def gconv(x_cat, w, b):
        ax = jnp.einsum("nm,bmf->bnf", lap, x_cat)
        return jnp.einsum("bnf,fo->bno", ax, w) + b.reshape(1, 1, -1)

    h3 = hidden_state.reshape(B, N, H)
    conc = jax.nn.sigmoid(
        gconv(jnp.concatenate([inputs, h3], -1), params["w1"], params["b1"])
    ).reshape(B, N * 2 * H)
    r, u = jnp.split(conc, 2, axis=1)
    rh = (r * hidden_state).reshape(B, N, H)
    c = jnp.tanh(
        gconv(jnp.concatenate([inputs, rh], -1), params["w2"], params["b2"])
    ).reshape(B, N * H)
    return u * hidden_state + (1.0 - u) * c


if __name__ == "__main__":
    key = jax.random.PRNGKey(0)
    k_adj, k_par, k_in, k_hid = jax.random.split(key, 4)

    B, N, C, H = 2, 16, 2, 32            # batch, nodes, input_dim(=2), hidden_dim
    a = jax.random.uniform(k_adj, (N, N), jnp.float32)
    adj = 0.5 * (a + a.T)                # symmetric non-negative adjacency

    params = init_params(k_par, adj, C, H, B)
    inputs = jax.random.normal(k_in, (B, N, C), jnp.float32)
    hidden = jax.random.normal(k_hid, (B, N * H), jnp.float32)

    new_h, _ = tgcn_cell(params, inputs, hidden)
    new_h = jax.block_until_ready(new_h)

    ref = tgcn_cell_ref(params, inputs, hidden)
    err = float(jnp.max(jnp.abs(new_h - ref)))
    assert jnp.allclose(new_h, ref, atol=1e-4, rtol=1e-4), f"max abs err {err}"

    print("KERNEL_OK")
</pallas_src>

<mosaic_0001>
module attributes {stable_mosaic.version = 11 : i64} {
  func.func @_tgcn_cell_fused_kernel(%arg0: memref<32x32xf32, #tpu.memory_space<vmem>>, %arg1: memref<4x32x32xf32, #tpu.memory_space<vmem>>, %arg2: memref<32x2xf32, #tpu.memory_space<vmem>>, %arg3: memref<32x32xf32, #tpu.memory_space<vmem>>, %arg4: memref<2x64xf32, #tpu.memory_space<vmem>>, %arg5: memref<32x64xf32, #tpu.memory_space<vmem>>, %arg6: memref<1x64xf32, #tpu.memory_space<vmem>>, %arg7: memref<2x32xf32, #tpu.memory_space<vmem>>, %arg8: memref<32x32xf32, #tpu.memory_space<vmem>>, %arg9: memref<1x32xf32, #tpu.memory_space<vmem>>, %arg10: memref<32x32xf32, #tpu.memory_space<vmem>>) attributes {dimension_semantics = [], scalar_prefetch = 0 : i64, scratch_operands = 0 : i64, tpu.core_type = #tpu.core_type<tc>} {
    %c0 = arith.constant 0 : index
    %c0_0 = arith.constant 0 : index
    %0 = vector.load %arg0[%c0, %c0_0] : memref<32x32xf32, #tpu.memory_space<vmem>>, vector<32x32xf32>
    %c0_1 = arith.constant 0 : index
    %c0_2 = arith.constant 0 : index
    %1 = vector.load %arg3[%c0_1, %c0_2] : memref<32x32xf32, #tpu.memory_space<vmem>>, vector<32x32xf32>
    %c0_3 = arith.constant 0 : index
    %c0_4 = arith.constant 0 : index
    %2 = vector.load %arg2[%c0_3, %c0_4] : memref<32x2xf32, #tpu.memory_space<vmem>>, vector<32x2xf32>
    %cst = arith.constant dense<0.000000e+00> : vector<32x2xf32>
    %3 = tpu.matmul %0, %2, %cst {dimension_numbers = #tpu.dot_dimension_numbers<[1], [0], [0], [1], [0, 0, 1, 1], [], []>} : vector<32x32xf32>, vector<32x2xf32>, vector<32x2xf32> -> vector<32x2xf32>
    %cst_5 = arith.constant dense<0.000000e+00> : vector<32x32xf32>
    %4 = tpu.matmul %0, %1, %cst_5 {dimension_numbers = #tpu.dot_dimension_numbers<[1], [0], [0], [1], [0, 0, 1, 1], [], []>} : vector<32x32xf32>, vector<32x32xf32>, vector<32x32xf32> -> vector<32x32xf32>
    %c0_6 = arith.constant 0 : index
    %c0_7 = arith.constant 0 : index
    %5 = vector.load %arg4[%c0_6, %c0_7] : memref<2x64xf32, #tpu.memory_space<vmem>>, vector<2x64xf32>
    %cst_8 = arith.constant dense<0.000000e+00> : vector<32x64xf32>
    %6 = tpu.matmul %3, %5, %cst_8 {dimension_numbers = #tpu.dot_dimension_numbers<[1], [0], [0], [1], [0, 0, 1, 1], [], []>} : vector<32x2xf32>, vector<2x64xf32>, vector<32x64xf32> -> vector<32x64xf32>
    %c0_9 = arith.constant 0 : index
    %c0_10 = arith.constant 0 : index
    %7 = vector.load %arg5[%c0_9, %c0_10] : memref<32x64xf32, #tpu.memory_space<vmem>>, vector<32x64xf32>
    %cst_11 = arith.constant dense<0.000000e+00> : vector<32x64xf32>
    %8 = tpu.matmul %4, %7, %cst_11 {dimension_numbers = #tpu.dot_dimension_numbers<[1], [0], [0], [1], [0, 0, 1, 1], [], []>} : vector<32x32xf32>, vector<32x64xf32>, vector<32x64xf32> -> vector<32x64xf32>
    %9 = arith.addf %6, %8 : vector<32x64xf32>
    %c0_12 = arith.constant 0 : index
    %c0_13 = arith.constant 0 : index
    %10 = vector.load %arg6[%c0_12, %c0_13] : memref<1x64xf32, #tpu.memory_space<vmem>>, vector<1x64xf32>
    %11 = vector.broadcast %10 : vector<1x64xf32> to vector<32x64xf32>
    %12 = arith.addf %9, %11 : vector<32x64xf32>
    %13 = arith.negf %12 : vector<32x64xf32>
    %14 = math.exp %13 : vector<32x64xf32>
    %cst_14 = arith.constant 1.000000e+00 : f32
    %15 = vector.broadcast %cst_14 : f32 to vector<32x64xf32>
    %16 = arith.addf %15, %14 : vector<32x64xf32>
    %17 = arith.divf %15, %16 : vector<32x64xf32>
    %18 = vector.extract_strided_slice %17 {offsets = [0, 0], sizes = [32, 32], strides = [1, 1]} : vector<32x64xf32> to vector<32x32xf32>
    %19 = vector.extract_strided_slice %17 {offsets = [0, 32], sizes = [32, 32], strides = [1, 1]} : vector<32x64xf32> to vector<32x32xf32>
    %c0_15 = arith.constant 0 : index
    %c0_16 = arith.constant 0 : index
    %c0_17 = arith.constant 0 : index
    %20 = vector.load %arg1[%c0_15, %c0_16, %c0_17] : memref<4x32x32xf32, #tpu.memory_space<vmem>>, vector<1x32x32xf32>
    %21 = vector.shape_cast %20 : vector<1x32x32xf32> to vector<32x32xf32>
    %cst_18 = arith.constant dense<0.000000e+00> : vector<32x32xf32>
    %22 = tpu.matmul %21, %18, %cst_18 {dimension_numbers = #tpu.dot_dimension_numbers<[1], [0], [0], [1], [0, 0, 1, 1], [], []>} : vector<32x32xf32>, vector<32x32xf32>, vector<32x32xf32> -> vector<32x32xf32>
    %c1 = arith.constant 1 : index
    %c0_19 = arith.constant 0 : index
    %c0_20 = arith.constant 0 : index
    %23 = vector.load %arg1[%c1, %c0_19, %c0_20] : memref<4x32x32xf32, #tpu.memory_space<vmem>>, vector<1x32x32xf32>
    %24 = vector.shape_cast %23 : vector<1x32x32xf32> to vector<32x32xf32>
    %cst_21 = arith.constant dense<0.000000e+00> : vector<32x32xf32>
    %25 = tpu.matmul %24, %19, %cst_21 {dimension_numbers = #tpu.dot_dimension_numbers<[1], [0], [0], [1], [0, 0, 1, 1], [], []>} : vector<32x32xf32>, vector<32x32xf32>, vector<32x32xf32> -> vector<32x32xf32>
    %26 = arith.addf %22, %25 : vector<32x32xf32>
    %c2 = arith.constant 2 : index
    %c0_22 = arith.constant 0 : index
    %c0_23 = arith.constant 0 : index
    %27 = vector.load %arg1[%c2, %c0_22, %c0_23] : memref<4x32x32xf32, #tpu.memory_space<vmem>>, vector<1x32x32xf32>
    %28 = vector.shape_cast %27 : vector<1x32x32xf32> to vector<32x32xf32>
    %cst_24 = arith.constant dense<0.000000e+00> : vector<32x32xf32>
    %29 = tpu.matmul %28, %18, %cst_24 {dimension_numbers = #tpu.dot_dimension_numbers<[1], [0], [0], [1], [0, 0, 1, 1], [], []>} : vector<32x32xf32>, vector<32x32xf32>, vector<32x32xf32> -> vector<32x32xf32>
    %c3 = arith.constant 3 : index
    %c0_25 = arith.constant 0 : index
    %c0_26 = arith.constant 0 : index
    %30 = vector.load %arg1[%c3, %c0_25, %c0_26] : memref<4x32x32xf32, #tpu.memory_space<vmem>>, vector<1x32x32xf32>
    %31 = vector.shape_cast %30 : vector<1x32x32xf32> to vector<32x32xf32>
    %cst_27 = arith.constant dense<0.000000e+00> : vector<32x32xf32>
    %32 = tpu.matmul %31, %19, %cst_27 {dimension_numbers = #tpu.dot_dimension_numbers<[1], [0], [0], [1], [0, 0, 1, 1], [], []>} : vector<32x32xf32>, vector<32x32xf32>, vector<32x32xf32> -> vector<32x32xf32>
    %33 = arith.addf %29, %32 : vector<32x32xf32>
    %34 = arith.mulf %26, %1 : vector<32x32xf32>
    %cst_28 = arith.constant dense<0.000000e+00> : vector<32x32xf32>
    %35 = tpu.matmul %0, %34, %cst_28 {dimension_numbers = #tpu.dot_dimension_numbers<[1], [0], [0], [1], [0, 0, 1, 1], [], []>} : vector<32x32xf32>, vector<32x32xf32>, vector<32x32xf32> -> vector<32x32xf32>
    %c0_29 = arith.constant 0 : index
    %c0_30 = arith.constant 0 : index
    %36 = vector.load %arg7[%c0_29, %c0_30] : memref<2x32xf32, #tpu.memory_space<vmem>>, vector<2x32xf32>
    %cst_31 = arith.constant dense<0.000000e+00> : vector<32x32xf32>
    %37 = tpu.matmul %3, %36, %cst_31 {dimension_numbers = #tpu.dot_dimension_numbers<[1], [0], [0], [1], [0, 0, 1, 1], [], []>} : vector<32x2xf32>, vector<2x32xf32>, vector<32x32xf32> -> vector<32x32xf32>
    %c0_32 = arith.constant 0 : index
    %c0_33 = arith.constant 0 : index
    %38 = vector.load %arg8[%c0_32, %c0_33] : memref<32x32xf32, #tpu.memory_space<vmem>>, vector<32x32xf32>
    %cst_34 = arith.constant dense<0.000000e+00> : vector<32x32xf32>
    %39 = tpu.matmul %35, %38, %cst_34 {dimension_numbers = #tpu.dot_dimension_numbers<[1], [0], [0], [1], [0, 0, 1, 1], [], []>} : vector<32x32xf32>, vector<32x32xf32>, vector<32x32xf32> -> vector<32x32xf32>
    %40 = arith.addf %37, %39 : vector<32x32xf32>
    %c0_35 = arith.constant 0 : index
    %c0_36 = arith.constant 0 : index
    %41 = vector.load %arg9[%c0_35, %c0_36] : memref<1x32xf32, #tpu.memory_space<vmem>>, vector<1x32xf32>
    %42 = vector.broadcast %41 : vector<1x32xf32> to vector<32x32xf32>
    %43 = arith.addf %40, %42 : vector<32x32xf32>
    %44 = math.tanh %43 : vector<32x32xf32>
    %45 = arith.mulf %33, %1 : vector<32x32xf32>
    %cst_37 = arith.constant 1.000000e+00 : f32
    %46 = vector.broadcast %cst_37 : f32 to vector<32x32xf32>
    %47 = arith.subf %46, %33 : vector<32x32xf32>
    %48 = arith.mulf %47, %44 : vector<32x32xf32>
    %49 = arith.addf %45, %48 : vector<32x32xf32>
    %c0_38 = arith.constant 0 : index
    %c0_39 = arith.constant 0 : index
    %50 = vector.load %arg10[%c0_38, %c0_39] : memref<32x32xf32, #tpu.memory_space<vmem>>, vector<32x32xf32>
    tpu.vector_store %arg10[%c0_38, %c0_39], %49 {strides = array<i32>} : memref<32x32xf32, #tpu.memory_space<vmem>>, vector<32x32xf32>,
    return
  }
}

</mosaic_0001>

<llo_original>
// kernel: tpu_custom_call.1
$region0: #{tpu_custom_call.1}
  #allocation0 [shape = 'u32[]', space=smem, size = 0x4, offset = 0x4, fixed_abs, tag = 'smem constant byte address 0x4 - core index']
  #allocation1 [shape = 'u32[144,128]{1,0:T(1,128)}', space=vmem, size = 0x12000, scoped, tag = 'internal scratch']
  %s0 = inlined_call_operand.vmem [shape: f32[32,32], index: 0, kind: input, shape index: {}]
  %s1 = inlined_call_operand.hbm [shape: f32[4,32,32], index: 1, kind: input, shape index: {}]
  %s2 = inlined_call_operand.vmem [shape: f32[32,2], index: 2, kind: input, shape index: {}]
  %s3 = inlined_call_operand.hbm [shape: f32[32,32], index: 3, kind: input, shape index: {}]
  %s4 = inlined_call_operand.hbm [shape: f32[2,64], index: 4, kind: input, shape index: {}]
  %s5 = inlined_call_operand.hbm [shape: f32[32,64], index: 5, kind: input, shape index: {}]
  %s6 = inlined_call_operand.hbm [shape: f32[1,64], index: 6, kind: input, shape index: {}]
  %s7 = inlined_call_operand.hbm [shape: f32[2,32], index: 7, kind: input, shape index: {}]
  %s8 = inlined_call_operand.vmem [shape: f32[32,32], index: 8, kind: input, shape index: {}]
  %s9 = inlined_call_operand.vmem [shape: f32[1,32], index: 9, kind: input, shape index: {}]
  %s10 = inlined_call_operand.hbm [shape: f32[32,32], index: 10, kind: output, shape index: {}]
  %s11 = sld [smem:[#allocation0]]
  $region74: #{tpu_custom_call.1} parent=0
    _
  %s13 = ssub.s32 1, %s11
  %s14 = scalar_select 0, %s13, %s11
  $region1: #{tpu_custom_call.1} parent=0
    #allocation2 [shape = 'u8[65536]{0}', space=vmem, size = 0x10000, scoped, tag = 'input window, operand 1, single buffered']
    #allocation3 [shape = 's32[1]{0}', space=sflag, size = 0x4, scoped, tag = 'scoped memory for tpu_custom_call.1']
    #allocation4 [shape = 's32[1]{0}', space=sflag, size = 0x4, scoped, tag = 'scoped memory for tpu_custom_call.1']
    #allocation5 [shape = 'u8[16384]{0}', space=vmem, size = 0x4000, scoped, tag = 'input window, operand 3, single buffered']
    #allocation6 [shape = 's32[1]{0}', space=sflag, size = 0x4, scoped, tag = 'scoped memory for tpu_custom_call.1']
    #allocation7 [shape = 'u8[1024]{0}', space=vmem, size = 0x400, scoped, tag = 'input window, operand 4, single buffered']
    #allocation8 [shape = 'u8[16384]{0}', space=vmem, size = 0x4000, scoped, tag = 'input window, operand 5, single buffered']
    #allocation9 [shape = 's32[1]{0}', space=sflag, size = 0x4, scoped, tag = 'scoped memory for tpu_custom_call.1']
    #allocation10 [shape = 'u8[512]{0}', space=vmem, size = 0x400, scoped, tag = 'input window, operand 6, single buffered']
    #allocation11 [shape = 'u8[1024]{0}', space=vmem, size = 0x400, scoped, tag = 'input window, operand 7, single buffered']
    #allocation12 [shape = 's32[1]{0}', space=sflag, size = 0x4, scoped, tag = 'scoped memory for tpu_custom_call.1']
    #allocation13 [shape = 'u8[16384]{0}', space=vmem, size = 0x4000, scoped, tag = 'output window, operand 0, single buffered']
    %15 = vsyncpa [#allocation3], 0
    %16 = vsyncpa [#allocation6], 0
    %17 = vsyncpa [#allocation9], 0
    %18 = vsyncpa [#allocation12], 0
    %19 = vsyncpa [#allocation4], 0
    // Predicated region
    $region2: #{tpu_custom_call.1} parent=1 // pred_check
      _
    $region3: #{tpu_custom_call.1} parent=1 // pred_check_branch
      %21 = sbr.rel (0) target = $region5
    $region4: #{tpu_custom_call.1} parent=1 // pred_region
      _
    $region5: #{tpu_custom_call.1} parent=1 // pred_fallthru
      _
    // Predicated region
    $region6: #{tpu_custom_call.1} parent=1 // pred_check
      _
    $region7: #{tpu_custom_call.1} parent=1 // pred_check_branch
      %23 = sbr.rel (0) target = $region9
    $region8: #{tpu_custom_call.1} parent=1 // pred_region
      %s25 = ssub.s32 2048, 2048
      %26 = vsyncadd [#allocation3], %s25
      %s27 = sshll.u32 [#allocation2], 4
      %s28 = int_to_ptr.vmem [resolvable:$true] %s27
      %33 = dma.hbm_to_vmem [thread:$0]  %s1, 2048, %s28, [#allocation3], 128, 128, 8
    $region9: #{tpu_custom_call.1} parent=1 // pred_fallthru
      _
    // Predicated region
    $region10: #{tpu_custom_call.1} parent=1 // pred_check
      _
    $region11: #{tpu_custom_call.1} parent=1 // pred_check_branch
      %35 = sbr.rel (0) target = $region13
    $region12: #{tpu_custom_call.1} parent=1 // pred_region
      _
    $region13: #{tpu_custom_call.1} parent=1 // pred_fallthru
      _
    // Predicated region
    $region14: #{tpu_custom_call.1} parent=1 // pred_check
      _
    $region15: #{tpu_custom_call.1} parent=1 // pred_check_branch
      %37 = sbr.rel (0) target = $region17
    $region16: #{tpu_custom_call.1} parent=1 // pred_region
      %s39 = ssub.s32 512, 512
      %40 = vsyncadd [#allocation6], %s39
      %s41 = sshll.u32 [#allocation5], 4
      %s42 = int_to_ptr.vmem [resolvable:$true] %s41
      %47 = dma.hbm_to_vmem [thread:$0]  %s3, 512, %s42, [#allocation6], 128, 128, 8
    $region17: #{tpu_custom_call.1} parent=1 // pred_fallthru
      _
    // Predicated region
    $region18: #{tpu_custom_call.1} parent=1 // pred_check
      _
    $region19: #{tpu_custom_call.1} parent=1 // pred_check_branch
      %49 = sbr.rel (0) target = $region21
    $region20: #{tpu_custom_call.1} parent=1 // pred_region
      %s51 = ssub.s32 32, 32
      %52 = vsyncadd [#allocation6], %s51
      %s54 = sshll.u32 [#allocation7], 4
      %s55 = int_to_ptr.vmem [resolvable:$true] %s54
      %57 = dma.hbm_to_vmem [thread:$0]  %s4, 32, %s55, [#allocation6]
    $region21: #{tpu_custom_call.1} parent=1 // pred_fallthru
      _
    // Predicated region
    $region22: #{tpu_custom_call.1} parent=1 // pred_check
      _
    $region23: #{tpu_custom_call.1} parent=1 // pred_check_branch
      %59 = sbr.rel (0) target = $region25
    $region24: #{tpu_custom_call.1} parent=1 // pred_region
      %s61 = ssub.s32 512, 512
      %62 = vsyncadd [#allocation9], %s61
      %s63 = sshll.u32 [#allocation8], 4
      %s64 = int_to_ptr.vmem [resolvable:$true] %s63
      %69 = dma.hbm_to_vmem [thread:$0]  %s5, 512, %s64, [#allocation9], 128, 128, 8
    $region25: #{tpu_custom_call.1} parent=1 // pred_fallthru
      _
    // Predicated region
    $region26: #{tpu_custom_call.1} parent=1 // pred_check
      _
    $region27: #{tpu_custom_call.1} parent=1 // pred_check_branch
      %71 = sbr.rel (0) target = $region29
    $region28: #{tpu_custom_call.1} parent=1 // pred_region
      %s73 = ssub.s32 16, 16
      %74 = vsyncadd [#allocation9], %s73
      %s76 = sshll.u32 [#allocation10], 4
      %s77 = int_to_ptr.vmem [resolvable:$true] %s76
      %79 = dma.hbm_to_vmem [thread:$0]  %s6, 16, %s77, [#allocation9]
    $region29: #{tpu_custom_call.1} parent=1 // pred_fallthru
      _
    // Predicated region
    $region30: #{tpu_custom_call.1} parent=1 // pred_check
      _
    $region31: #{tpu_custom_call.1} parent=1 // pred_check_branch
      %81 = sbr.rel (0) target = $region33
    $region32: #{tpu_custom_call.1} parent=1 // pred_region
      %s83 = ssub.s32 32, 32
      %84 = vsyncadd [#allocation12], %s83
      %s86 = sshll.u32 [#allocation11], 4
      %s87 = int_to_ptr.vmem [resolvable:$true] %s86
      %89 = dma.hbm_to_vmem [thread:$0]  %s7, 32, %s87, [#allocation12]
    $region33: #{tpu_custom_call.1} parent=1 // pred_fallthru
      _
    // Predicated region
    $region34: #{tpu_custom_call.1} parent=1 // pred_check
      _
    $region35: #{tpu_custom_call.1} parent=1 // pred_check_branch
      %91 = sbr.rel (0) target = $region37
    $region36: #{tpu_custom_call.1} parent=1 // pred_region
      _
    $region37: #{tpu_custom_call.1} parent=1 // pred_fallthru
      _
    // Predicated region
    $region38: #{tpu_custom_call.1} parent=1 // pred_check
      _
    $region39: #{tpu_custom_call.1} parent=1 // pred_check_branch
      %93 = sbr.rel (0) target = $region41
    $region40: #{tpu_custom_call.1} parent=1 // pred_region
      _
    $region41: #{tpu_custom_call.1} parent=1 // pred_fallthru
      _
    // Predicated region
    $region42: #{tpu_custom_call.1} parent=1 // pred_check
      _
    $region43: #{tpu_custom_call.1} parent=1 // pred_check_branch
      %95 = sbr.rel (0) target = $region45
    $region44: #{tpu_custom_call.1} parent=1 // pred_region
      %96 = dma.done [#allocation3], 2048
    $region45: #{tpu_custom_call.1} parent=1 // pred_fallthru
      _
    // Predicated region
    $region46: #{tpu_custom_call.1} parent=1 // pred_check
      _
    $region47: #{tpu_custom_call.1} parent=1 // pred_check_branch
      %98 = sbr.rel (0) target = $region49
    $region48: #{tpu_custom_call.1} parent=1 // pred_region
      %99 = dma.done [#allocation6], 512
    $region49: #{tpu_custom_call.1} parent=1 // pred_fallthru
      _
    // Predicated region
    $region50: #{tpu_custom_call.1} parent=1 // pred_check
      _
    $region51: #{tpu_custom_call.1} parent=1 // pred_check_branch
      %101 = sbr.rel (0) target = $region53
    $region52: #{tpu_custom_call.1} parent=1 // pred_region
      %102 = dma.done [#allocation6], 32
    $region53: #{tpu_custom_call.1} parent=1 // pred_fallthru
      _
    // Predicated region
    $region54: #{tpu_custom_call.1} parent=1 // pred_check
      _
    $region55: #{tpu_custom_call.1} parent=1 // pred_check_branch
      %104 = sbr.rel (0) target = $region57
    $region56: #{tpu_custom_call.1} parent=1 // pred_region
      %105 = dma.done [#allocation9], 512
    $region57: #{tpu_custom_call.1} parent=1 // pred_fallthru
      _
    // Predicated region
    $region58: #{tpu_custom_call.1} parent=1 // pred_check
      _
    $region59: #{tpu_custom_call.1} parent=1 // pred_check_branch
      %107 = sbr.rel (0) target = $region61
    $region60: #{tpu_custom_call.1} parent=1 // pred_region
      %108 = dma.done [#allocation9], 16
    $region61: #{tpu_custom_call.1} parent=1 // pred_fallthru
      _
    // Predicated region
    $region62: #{tpu_custom_call.1} parent=1 // pred_check
      _
    $region63: #{tpu_custom_call.1} parent=1 // pred_check_branch
      %110 = sbr.rel (0) target = $region65
    $region64: #{tpu_custom_call.1} parent=1 // pred_region
      %111 = dma.done [#allocation12], 32
    $region65: #{tpu_custom_call.1} parent=1 // pred_fallthru
      _
    %v112 = vld [vmem:[%s0] sm:$0xff]
    %v113 = vld [vmem:[%s0 + $0x8] sm:$0xff]
    %v114 = vld [vmem:[%s0 + $0x10] sm:$0xff]
    %v115 = vld [vmem:[%s0 + $0x18] sm:$0xff]
    %v116 = vld [vmem:[#allocation5] sm:$0xff]
    %v117 = vld [vmem:[#allocation5 + $0x8] sm:$0xff]
    %v118 = vld [vmem:[#allocation5 + $0x10] sm:$0xff]
    %v119 = vld [vmem:[#allocation5 + $0x18] sm:$0xff]
    %v120 = vld [vmem:[%s2] sm:$0xff]
    %v121 = vld [vmem:[%s2 + $0x8] sm:$0xff]
    %v122 = vld [vmem:[%s2 + $0x10] sm:$0xff]
    %v123 = vld [vmem:[%s2 + $0x18] sm:$0xff]
    %vm124 = vcmask 261120
    %v126 = vsel %vm124, %v112, 0
    %v129 = vsel %vm124, %v113, 0
    %v132 = vsel %vm124, %v114, 0
    %v135 = vsel %vm124, %v115, 0
    %137 = vmatprep.subr.mxu0 0.0
    %138 = vmatpush1.msra.mxu0 %v120
    %139 = vmatprep.subr.mxu0 0.0
    %140 = vmatpush1.msra.mxu0 %v121
    %141 = vmatprep.subr.mxu0 0.0
    %142 = vmatpush1.msra.mxu0 %v122
    %143 = vmatprep.subr.mxu0 0.0
    %144 = vmatpush1.msra.mxu0 %v123
    %145 = vmatprep.subr.mxu0 0.0
    %146 = vmatpush1.msra.mxu0 0.0
    %147 = vmatprep.subr.mxu0 0.0
    %148 = vmatpush1.msra.mxu0 0.0
    %149 = vmatprep.subr.mxu0 0.0
    %150 = vmatpush1.msra.mxu0 0.0
    %151 = vmatprep.subr.mxu0 0.0
    %152 = vmatpush1.msra.mxu0 0.0
    %153 = vmatprep.subr.mxu0 0.0
    %154 = vmatpush1.msra.mxu0 0.0
    %155 = vmatprep.subr.mxu0 0.0
    %156 = vmatpush1.msra.mxu0 0.0
    %157 = vmatprep.subr.mxu0 0.0
    %158 = vmatpush1.msra.mxu0 0.0
    %159 = vmatprep.subr.mxu0 0.0
    %160 = vmatpush1.msra.mxu0 0.0
    %161 = vmatprep.subr.mxu0 0.0
    %162 = vmatpush1.msra.mxu0 0.0
    %163 = vmatprep.subr.mxu0 0.0
    %164 = vmatpush1.msra.mxu0 0.0
    %165 = vmatprep.subr.mxu0 0.0
    %166 = vmatpush1.msra.mxu0 0.0
    %167 = vmatprep.subr.mxu0 0.0
    %168 = vmatpush1.msra.mxu0 0.0
    %169 = vmatprep.subr.mxu0 0.0
    %170 = vmatpush1.msra.mxu0 0.0
    %171 = vmatprep.subr.mxu0 0.0
    %172 = vmatpush1.msra.mxu0 0.0
    %173 = vmatprep.subr.mxu0 0.0
    %174 = vmatpush1.msra.mxu0 0.0
    %175 = vmatprep.subr.mxu0 0.0
    %176 = vmatpush1.msra.mxu0 0.0
    %177 = vmatprep.subr.mxu0 0.0
    %178 = vmatpush1.msra.mxu0 0.0
    %179 = vmatprep.subr.mxu0 0.0
    %180 = vmatpush1.msra.mxu0 0.0
    %181 = vmatprep.subr.mxu0 0.0
    %182 = vmatpush1.msra.mxu0 0.0
    %183 = vmatprep.subr.mxu0 0.0
    %184 = vmatpush1.msra.mxu0 0.0
    %185 = vmatprep.subr.mxu0 0.0
    %186 = vmatpush1.msra.mxu0 0.0
    %187 = vmatprep.subr.mxu0 0.0
    %188 = vmatpush1.msra.mxu0 0.0
    %189 = vmatprep.subr.mxu0 0.0
    %190 = vmatpush1.msra.mxu0 0.0
    %191 = vmatprep.subr.mxu0 0.0
    %192 = vmatpush1.msra.mxu0 0.0
    %193 = vmatprep.subr.mxu0 0.0
    %194 = vmatpush1.msra.mxu0 0.0
    %195 = vmatprep.subr.mxu0 0.0
    %196 = vmatpush1.msra.mxu0 0.0
    %197 = vmatprep.subr.mxu0 0.0
    %198 = vmatpush1.msra.mxu0 0.0
    %199 = vmatprep.subr.mxu0 0.0
    %200 = vmatpush1.msra.mxu0 0.0
    %201 = vmatprep.mubr.f32.mxu0 0.0
    %202 = vmatmul.mubr.f32.gmra.mrb[0].mxu0 %v126
    %v203 = vpop.f32.mrb[0].mxu0
    %v204 = vadd.f32 0.0, %v203
    %v205 = vpop.f32.mrb[0].mxu0
    %206 = vmatprep.mubr.f32.mxu0 0.0
    %207 = vmatmul.mubr.f32.gmra.mrb[0].mxu0 %v129
    %v208 = vpop.f32.mrb[0].mxu0
    %v209 = vadd.f32 0.0, %v208
    %v210 = vpop.f32.mrb[0].mxu0
    %211 = vmatprep.mubr.f32.mxu0 0.0
    %212 = vmatmul.mubr.f32.gmra.mrb[0].mxu0 %v132
    %v213 = vpop.f32.mrb[0].mxu0
    %v214 = vadd.f32 0.0, %v213
    %v215 = vpop.f32.mrb[0].mxu0
    %216 = vmatprep.mubr.f32.mxu0 0.0
    %217 = vmatmul.mubr.f32.gmra.mrb[0].mxu0 %v135
    %v218 = vpop.f32.mrb[0].mxu0
    %v219 = vadd.f32 0.0, %v218
    %v220 = vpop.f32.mrb[0].mxu0
    %221 = vdwg.mxu0
    %222 = vmatprep.subr.mxu0 0.0
    %223 = vmatpush1.msra.mxu0 %v116
    %224 = vmatprep.subr.mxu0 0.0
    %225 = vmatpush1.msra.mxu0 %v117
    %226 = vmatprep.subr.mxu0 0.0
    %227 = vmatpush1.msra.mxu0 %v118
    %228 = vmatprep.subr.mxu0 0.0
    %229 = vmatpush1.msra.mxu0 %v119
    %230 = vmatprep.subr.mxu0 0.0
    %231 = vmatpush1.msra.mxu0 0.0
    %232 = vmatprep.subr.mxu0 0.0
    %233 = vmatpush1.msra.mxu0 0.0
    %234 = vmatprep.subr.mxu0 0.0
    %235 = vmatpush1.msra.mxu0 0.0
    %236 = vmatprep.subr.mxu0 0.0
    %237 = vmatpush1.msra.mxu0 0.0
    %238 = vmatprep.subr.mxu0 0.0
    %239 = vmatpush1.msra.mxu0 0.0
    %240 = vmatprep.subr.mxu0 0.0
    %241 = vmatpush1.msra.mxu0 0.0
    %242 = vmatprep.subr.mxu0 0.0
    %243 = vmatpush1.msra.mxu0 0.0
    %244 = vmatprep.subr.mxu0 0.0
    %245 = vmatpush1.msra.mxu0 0.0
    %246 = vmatprep.subr.mxu0 0.0
    %247 = vmatpush1.msra.mxu0 0.0
    %248 = vmatprep.subr.mxu0 0.0
    %249 = vmatpush1.msra.mxu0 0.0
    %250 = vmatprep.subr.mxu0 0.0
    %251 = vmatpush1.msra.mxu0 0.0
    %252 = vmatprep.subr.mxu0 0.0
    %253 = vmatpush1.msra.mxu0 0.0
    %254 = vmatprep.subr.mxu0 0.0
    %255 = vmatpush1.msra.mxu0 0.0
    %256 = vmatprep.subr.mxu0 0.0
    %257 = vmatpush1.msra.mxu0 0.0
    %258 = vmatprep.subr.mxu0 0.0
    %259 = vmatpush1.msra.mxu0 0.0
    %260 = vmatprep.subr.mxu0 0.0
    %261 = vmatpush1.msra.mxu0 0.0
    %262 = vmatprep.subr.mxu0 0.0
    %263 = vmatpush1.msra.mxu0 0.0
    %264 = vmatprep.subr.mxu0 0.0
    %265 = vmatpush1.msra.mxu0 0.0
    %266 = vmatprep.subr.mxu0 0.0
    %267 = vmatpush1.msra.mxu0 0.0
    %268 = vmatprep.subr.mxu0 0.0
    %269 = vmatpush1.msra.mxu0 0.0
    %270 = vmatprep.subr.mxu0 0.0
    %271 = vmatpush1.msra.mxu0 0.0
    %272 = vmatprep.subr.mxu0 0.0
    %273 = vmatpush1.msra.mxu0 0.0
    %274 = vmatprep.subr.mxu0 0.0
    %275 = vmatpush1.msra.mxu0 0.0
    %276 = vmatprep.subr.mxu0 0.0
    %277 = vmatpush1.msra.mxu0 0.0
    %278 = vmatprep.subr.mxu0 0.0
    %279 = vmatpush1.msra.mxu0 0.0
    %280 = vmatprep.subr.mxu0 0.0
    %281 = vmatpush1.msra.mxu0 0.0
    %282 = vmatprep.subr.mxu0 0.0
    %283 = vmatpush1.msra.mxu0 0.0
    %284 = vmatprep.subr.mxu0 0.0
    %285 = vmatpush1.msra.mxu0 0.0
    %286 = vmatprep.mubr.f32.mxu0 0.0
    %287 = vmatmul.mubr.f32.gmra.mrb[0].mxu0 %v126
    %v288 = vpop.f32.mrb[0].mxu0
    %v289 = vadd.f32 0.0, %v288
    %v290 = vpop.f32.mrb[0].mxu0
    %291 = vmatprep.mubr.f32.mxu0 0.0
    %292 = vmatmul.mubr.f32.gmra.mrb[0].mxu0 %v129
    %v293 = vpop.f32.mrb[0].mxu0
    %v294 = vadd.f32 0.0, %v293
    %v295 = vpop.f32.mrb[0].mxu0
    %296 = vmatprep.mubr.f32.mxu0 0.0
    %297 = vmatmul.mubr.f32.gmra.mrb[0].mxu0 %v132
    %v298 = vpop.f32.mrb[0].mxu0
    %v299 = vadd.f32 0.0, %v298
    %v300 = vpop.f32.mrb[0].mxu0
    %301 = vmatprep.mubr.f32.mxu0 0.0
    %302 = vmatmul.mubr.f32.gmra.mrb[0].mxu0 %v135
    %v303 = vpop.f32.mrb[0].mxu0
    %v304 = vadd.f32 0.0, %v303
    %v305 = vpop.f32.mrb[0].mxu0
    %306 = vdwg.mxu0
    %v307 = vld [vmem:[#allocation7] sm:$0x3]
    %v308 = vld [vmem:[#allocation8] sm:$0xff]
    %v309 = vld [vmem:[#allocation8 + $0x8] sm:$0xff]
    %v310 = vld [vmem:[#allocation8 + $0x10] sm:$0xff]
    %v311 = vld [vmem:[#allocation8 + $0x18] sm:$0xff]
    %v313 = vsel %vm124, %v289, 0
    %v316 = vsel %vm124, %v294, 0
    %v319 = vsel %vm124, %v299, 0
    %v322 = vsel %vm124, %v304, 0
    %324 = vmatprep.subr.mxu0 0.0
    %325 = vmatpush1.msra.mxu0 %v308
    %326 = vmatprep.subr.mxu0 0.0
    %327 = vmatpush1.msra.mxu0 %v309
    %328 = vmatprep.subr.mxu0 0.0
    %329 = vmatpush1.msra.mxu0 %v310
    %330 = vmatprep.subr.mxu0 0.0
    %331 = vmatpush1.msra.mxu0 %v311
    %332 = vmatprep.subr.mxu0 0.0
    %333 = vmatpush1.msra.mxu0 0.0
    %334 = vmatprep.subr.mxu0 0.0
    %335 = vmatpush1.msra.mxu0 0.0
    %336 = vmatprep.subr.mxu0 0.0
    %337 = vmatpush1.msra.mxu0 0.0
    %338 = vmatprep.subr.mxu0 0.0
    %339 = vmatpush1.msra.mxu0 0.0
    %340 = vmatprep.subr.mxu0 0.0
    %341 = vmatpush1.msra.mxu0 0.0
    %342 = vmatprep.subr.mxu0 0.0
    %343 = vmatpush1.msra.mxu0 0.0
    %344 = vmatprep.subr.mxu0 0.0
    %345 = vmatpush1.msra.mxu0 0.0
    %346 = vmatprep.subr.mxu0 0.0
    %347 = vmatpush1.msra.mxu0 0.0
    %348 = vmatprep.subr.mxu0 0.0
    %349 = vmatpush1.msra.mxu0 0.0
    %350 = vmatprep.subr.mxu0 0.0
    %351 = vmatpush1.msra.mxu0 0.0
    %352 = vmatprep.subr.mxu0 0.0
    %353 = vmatpush1.msra.mxu0 0.0
    %354 = vmatprep.subr.mxu0 0.0
    %355 = vmatpush1.msra.mxu0 0.0
    %356 = vmatprep.subr.mxu0 0.0
    %357 = vmatpush1.msra.mxu0 0.0
    %358 = vmatprep.subr.mxu0 0.0
    %359 = vmatpush1.msra.mxu0 0.0
    %360 = vmatprep.subr.mxu0 0.0
    %361 = vmatpush1.msra.mxu0 0.0
    %362 = vmatprep.subr.mxu0 0.0
    %363 = vmatpush1.msra.mxu0 0.0
    %364 = vmatprep.subr.mxu0 0.0
    %365 = vmatpush1.msra.mxu0 0.0
    %366 = vmatprep.subr.mxu0 0.0
    %367 = vmatpush1.msra.mxu0 0.0
    %368 = vmatprep.subr.mxu0 0.0
    %369 = vmatpush1.msra.mxu0 0.0
    %370 = vmatprep.subr.mxu0 0.0
    %371 = vmatpush1.msra.mxu0 0.0
    %372 = vmatprep.subr.mxu0 0.0
    %373 = vmatpush1.msra.mxu0 0.0
    %374 = vmatprep.subr.mxu0 0.0
    %375 = vmatpush1.msra.mxu0 0.0
    %376 = vmatprep.subr.mxu0 0.0
    %377 = vmatpush1.msra.mxu0 0.0
    %378 = vmatprep.subr.mxu0 0.0
    %379 = vmatpush1.msra.mxu0 0.0
    %380 = vmatprep.subr.mxu0 0.0
    %381 = vmatpush1.msra.mxu0 0.0
    %382 = vmatprep.subr.mxu0 0.0
    %383 = vmatpush1.msra.mxu0 0.0
    %384 = vmatprep.subr.mxu0 0.0
    %385 = vmatpush1.msra.mxu0 0.0
    %386 = vmatprep.subr.mxu0 0.0
    %387 = vmatpush1.msra.mxu0 0.0
    %388 = vmatprep.mubr.f32.mxu0 0.0
    %389 = vmatmul.mubr.f32.gmra.mrb[0].mxu0 %v313
    %v390 = vpop.f32.mrb[0].mxu0
    %v391 = vadd.f32 0.0, %v390
    %v392 = vpop.f32.mrb[0].mxu0
    %393 = vmatprep.mubr.f32.mxu0 0.0
    %394 = vmatmul.mubr.f32.gmra.mrb[0].mxu0 %v316
    %v395 = vpop.f32.mrb[0].mxu0
    %v396 = vadd.f32 0.0, %v395
    %v397 = vpop.f32.mrb[0].mxu0
    %398 = vmatprep.mubr.f32.mxu0 0.0
    %399 = vmatmul.mubr.f32.gmra.mrb[0].mxu0 %v319
    %v400 = vpop.f32.mrb[0].mxu0
    %v401 = vadd.f32 0.0, %v400
    %v402 = vpop.f32.mrb[0].mxu0
    %403 = vmatprep.mubr.f32.mxu0 0.0
    %404 = vmatmul.mubr.f32.gmra.mrb[0].mxu0 %v322
    %v405 = vpop.f32.mrb[0].mxu0
    %v406 = vadd.f32 0.0, %v405
    %v407 = vpop.f32.mrb[0].mxu0
    %408 = vdwg.mxu0
    %vm409 = vcmask 15360
    %v411 = vsel %vm409, %v204, 0
    %v414 = vsel %vm409, %v209, 0
    %v417 = vsel %vm409, %v214, 0
    %v420 = vsel %vm409, %v219, 0
    %vm422 = vcmask 1041408
    %v424 = vsel %vm422, %v307, 0
    %426 = vmatprep.subr.mxu0 0.0
    %427 = vmatpush1.msra.mxu0 %v424
    %428 = vmatprep.subr.mxu0 0.0
    %429 = vmatpush1.msra.mxu0 0.0
    %430 = vmatprep.subr.mxu0 0.0
    %431 = vmatpush1.msra.mxu0 0.0
    %432 = vmatprep.subr.mxu0 0.0
    %433 = vmatpush1.msra.mxu0 0.0
    %434 = vmatprep.subr.mxu0 0.0
    %435 = vmatpush1.msra.mxu0 0.0
    %436 = vmatprep.subr.mxu0 0.0
    %437 = vmatpush1.msra.mxu0 0.0
    %438 = vmatprep.subr.mxu0 0.0
    %439 = vmatpush1.msra.mxu0 0.0
    %440 = vmatprep.subr.mxu0 0.0
    %441 = vmatpush1.msra.mxu0 0.0
    %442 = vmatprep.subr.mxu0 0.0
    %443 = vmatpush1.msra.mxu0 0.0
    %444 = vmatprep.subr.mxu0 0.0
    %445 = vmatpush1.msra.mxu0 0.0
    %446 = vmatprep.subr.mxu0 0.0
    %447 = vmatpush1.msra.mxu0 0.0
    %448 = vmatprep.subr.mxu0 0.0
    %449 = vmatpush1.msra.mxu0 0.0
    %450 = vmatprep.subr.mxu0 0.0
    %451 = vmatpush1.msra.mxu0 0.0
    %452 = vmatprep.subr.mxu0 0.0
    %453 = vmatpush1.msra.mxu0 0.0
    %454 = vmatprep.subr.mxu0 0.0
    %455 = vmatpush1.msra.mxu0 0.0
    %456 = vmatprep.subr.mxu0 0.0
    %457 = vmatpush1.msra.mxu0 0.0
    %458 = vmatprep.subr.mxu0 0.0
    %459 = vmatpush1.msra.mxu0 0.0
    %460 = vmatprep.subr.mxu0 0.0
    %461 = vmatpush1.msra.mxu0 0.0
    %462 = vmatprep.subr.mxu0 0.0
    %463 = vmatpush1.msra.mxu0 0.0
    %464 = vmatprep.subr.mxu0 0.0
    %465 = vmatpush1.msra.mxu0 0.0
    %466 = vmatprep.subr.mxu0 0.0
    %467 = vmatpush1.msra.mxu0 0.0
    %468 = vmatprep.subr.mxu0 0.0
    %469 = vmatpush1.msra.mxu0 0.0
    %470 = vmatprep.subr.mxu0 0.0
    %471 = vmatpush1.msra.mxu0 0.0
    %472 = vmatprep.subr.mxu0 0.0
    %473 = vmatpush1.msra.mxu0 0.0
    %474 = vmatprep.subr.mxu0 0.0
    %475 = vmatpush1.msra.mxu0 0.0
    %476 = vmatprep.subr.mxu0 0.0
    %477 = vmatpush1.msra.mxu0 0.0
    %478 = vmatprep.subr.mxu0 0.0
    %479 = vmatpush1.msra.mxu0 0.0
    %480 = vmatprep.subr.mxu0 0.0
    %481 = vmatpush1.msra.mxu0 0.0
    %482 = vmatprep.subr.mxu0 0.0
    %483 = vmatpush1.msra.mxu0 0.0
    %484 = vmatprep.subr.mxu0 0.0
    %485 = vmatpush1.msra.mxu0 0.0
    %486 = vmatprep.subr.mxu0 0.0
    %487 = vmatpush1.msra.mxu0 0.0
    %488 = vmatprep.subr.mxu0 0.0
    %489 = vmatpush1.msra.mxu0 0.0
    %490 = vmatprep.mubr.f32.mxu0 0.0
    %491 = vmatmul.mubr.f32.gmra.mrb[0].mxu0 %v411
    %v492 = vpop.f32.mrb[0].mxu0
    %v493 = vadd.f32 %v391, %v492
    %v494 = vpop.f32.mrb[0].mxu0
    %495 = vmatprep.mubr.f32.mxu0 0.0
    %496 = vmatmul.mubr.f32.gmra.mrb[0].mxu0 %v414
    %v497 = vpop.f32.mrb[0].mxu0
    %v498 = vadd.f32 %v396, %v497
    %v499 = vpop.f32.mrb[0].mxu0
    %500 = vmatprep.mubr.f32.mxu0 0.0
    %501 = vmatmul.mubr.f32.gmra.mrb[0].mxu0 %v417
    %v502 = vpop.f32.mrb[0].mxu0
    %v503 = vadd.f32 %v401, %v502
    %v504 = vpop.f32.mrb[0].mxu0
    %505 = vmatprep.mubr.f32.mxu0 0.0
    %506 = vmatmul.mubr.f32.gmra.mrb[0].mxu0 %v420
    %v507 = vpop.f32.mrb[0].mxu0
    %v508 = vadd.f32 %v406, %v507
    %v509 = vpop.f32.mrb[0].mxu0
    %510 = vdwg.mxu0
    %v511 = vld [vmem:[#allocation10] sm:$0x1]
    %v513 = vlaneseq
    %v514 = vshrl.u32 %v513, 7
    %v515 = vsub.s32 0, %v514
    %v516 = vrot.slane %v511, %v515
    %v518 = vadd.f32 %v493, %v516
    %v519 = vadd.f32 %v498, %v516
    %v520 = vadd.f32 %v503, %v516
    %v521 = vadd.f32 %v508, %v516
    %v522 = vxor.u32 %v518, 2147483648
    %v523 = vxor.u32 %v519, 2147483648
    %v524 = vxor.u32 %v520, 2147483648
    %v525 = vxor.u32 %v521, 2147483648
    %v526 = vmul.f32 %v522, 1.442695
    %v527 = vpow.pop %v526
    %v528 = vmul.f32 %v523, 1.442695
    %v529 = vpow.pop %v528
    %v530 = vmul.f32 %v524, 1.442695
    %v531 = vpow.pop %v530
    %v532 = vmul.f32 %v525, 1.442695
    %v533 = vpow.pop %v532
    %v534 = vadd.f32 %v527, 1.0
    %v535 = vadd.f32 %v529, 1.0
    %v536 = vadd.f32 %v531, 1.0
    %v537 = vadd.f32 %v533, 1.0
    %v538 = vrcp.pop %v534
    %v539 = vmul.f32 1.0, %v538
    %v540 = vrcp.pop %v535
    %v541 = vmul.f32 1.0, %v540
    %v542 = vrcp.pop %v536
    %v543 = vmul.f32 1.0, %v542
    %v544 = vrcp.pop %v537
    %v545 = vmul.f32 1.0, %v544
    %v546 = vld [vmem:[#allocation2] sm:$0xff]
    %v547 = vld [vmem:[#allocation2 + $0x8] sm:$0xff]
    %v548 = vld [vmem:[#allocation2 + $0x10] sm:$0xff]
    %v549 = vld [vmem:[#allocation2 + $0x18] sm:$0xff]
    %s550 = scalar_lea.vmem [#allocation2], 32
    %v551 = vld [vmem:[%s550] sm:$0xff]
    %v552 = vld [vmem:[%s550 + $0x8] sm:$0xff]
    %v553 = vld [vmem:[%s550 + $0x10] sm:$0xff]
    %v554 = vld [vmem:[%s550 + $0x18] sm:$0xff]
    %559 = vrot.lane.b32.xlu0 %v539, 96
    %v560 = vpop.permute.xlu0 %559
    %561 = vrot.lane.b32.xlu0 %v541, 96
    %v562 = vpop.permute.xlu0 %561
    %563 = vrot.lane.b32.xlu0 %v543, 96
    %v564 = vpop.permute.xlu0 %563
    %565 = vrot.lane.b32.xlu0 %v545, 96
    %v566 = vpop.permute.xlu0 %565
    %v572 = vsel %vm124, %v551, 0
    %v575 = vsel %vm124, %v552, 0
    %v578 = vsel %vm124, %v553, 0
    %v581 = vsel %vm124, %v554, 0
    %583 = vmatprep.subr.mxu0 0.0
    %584 = vmatpush1.msra.mxu0 %v560
    %585 = vmatprep.subr.mxu0 0.0
    %586 = vmatpush1.msra.mxu0 %v562
    %587 = vmatprep.subr.mxu0 0.0
    %588 = vmatpush1.msra.mxu0 %v564
    %589 = vmatprep.subr.mxu0 0.0
    %590 = vmatpush1.msra.mxu0 %v566
    %591 = vmatprep.subr.mxu0 0.0
    %592 = vmatpush1.msra.mxu0 0.0
    %593 = vmatprep.subr.mxu0 0.0
    %594 = vmatpush1.msra.mxu0 0.0
    %595 = vmatprep.subr.mxu0 0.0
    %596 = vmatpush1.msra.mxu0 0.0
    %597 = vmatprep.subr.mxu0 0.0
    %598 = vmatpush1.msra.mxu0 0.0
    %599 = vmatprep.subr.mxu0 0.0
    %600 = vmatpush1.msra.mxu0 0.0
    %601 = vmatprep.subr.mxu0 0.0
    %602 = vmatpush1.msra.mxu0 0.0
    %603 = vmatprep.subr.mxu0 0.0
    %604 = vmatpush1.msra.mxu0 0.0
    %605 = vmatprep.subr.mxu0 0.0
    %606 = vmatpush1.msra.mxu0 0.0
    %607 = vmatprep.subr.mxu0 0.0
    %608 = vmatpush1.msra.mxu0 0.0
    %609 = vmatprep.subr.mxu0 0.0
    %610 = vmatpush1.msra.mxu0 0.0
    %611 = vmatprep.subr.mxu0 0.0
    %612 = vmatpush1.msra.mxu0 0.0
    %613 = vmatprep.subr.mxu0 0.0
    %614 = vmatpush1.msra.mxu0 0.0
    %615 = vmatprep.subr.mxu0 0.0
    %616 = vmatpush1.msra.mxu0 0.0
    %617 = vmatprep.subr.mxu0 0.0
    %618 = vmatpush1.msra.mxu0 0.0
    %619 = vmatprep.subr.mxu0 0.0
    %620 = vmatpush1.msra.mxu0 0.0
    %621 = vmatprep.subr.mxu0 0.0
    %622 = vmatpush1.msra.mxu0 0.0
    %623 = vmatprep.subr.mxu0 0.0
    %624 = vmatpush1.msra.mxu0 0.0
    %625 = vmatprep.subr.mxu0 0.0
    %626 = vmatpush1.msra.mxu0 0.0
    %627 = vmatprep.subr.mxu0 0.0
    %628 = vmatpush1.msra.mxu0 0.0
    %629 = vmatprep.subr.mxu0 0.0
    %630 = vmatpush1.msra.mxu0 0.0
    %631 = vmatprep.subr.mxu0 0.0
    %632 = vmatpush1.msra.mxu0 0.0
    %633 = vmatprep.subr.mxu0 0.0
    %634 = vmatpush1.msra.mxu0 0.0
    %635 = vmatprep.subr.mxu0 0.0
    %636 = vmatpush1.msra.mxu0 0.0
    %637 = vmatprep.subr.mxu0 0.0
    %638 = vmatpush1.msra.mxu0 0.0
    %639 = vmatprep.subr.mxu0 0.0
    %640 = vmatpush1.msra.mxu0 0.0
    %641 = vmatprep.subr.mxu0 0.0
    %642 = vmatpush1.msra.mxu0 0.0
    %643 = vmatprep.subr.mxu0 0.0
    %644 = vmatpush1.msra.mxu0 0.0
    %645 = vmatprep.subr.mxu0 0.0
    %646 = vmatpush1.msra.mxu0 0.0
    %647 = vmatprep.mubr.f32.mxu0 0.0
    %648 = vmatmul.mubr.f32.gmra.mrb[0].mxu0 %v572
    %v649 = vpop.f32.mrb[0].mxu0
    %v650 = vadd.f32 0.0, %v649
    %v651 = vpop.f32.mrb[0].mxu0
    %652 = vmatprep.mubr.f32.mxu0 0.0
    %653 = vmatmul.mubr.f32.gmra.mrb[0].mxu0 %v575
    %v654 = vpop.f32.mrb[0].mxu0
    %v655 = vadd.f32 0.0, %v654
    %v656 = vpop.f32.mrb[0].mxu0
    %657 = vmatprep.mubr.f32.mxu0 0.0
    %658 = vmatmul.mubr.f32.gmra.mrb[0].mxu0 %v578
    %v659 = vpop.f32.mrb[0].mxu0
    %v660 = vadd.f32 0.0, %v659
    %v661 = vpop.f32.mrb[0].mxu0
    %662 = vmatprep.mubr.f32.mxu0 0.0
    %663 = vmatmul.mubr.f32.gmra.mrb[0].mxu0 %v581
    %v664 = vpop.f32.mrb[0].mxu0
    %v665 = vadd.f32 0.0, %v664
    %v666 = vpop.f32.mrb[0].mxu0
    %667 = vdwg.mxu0
    %v669 = vsel %vm124, %v546, 0
    %v672 = vsel %vm124, %v547, 0
    %v675 = vsel %vm124, %v548, 0
    %v678 = vsel %vm124, %v549, 0
    %680 = vmatprep.subr.mxu0 0.0
    %681 = vmatpush1.msra.mxu0 %v539
    %682 = vmatprep.subr.mxu0 0.0
    %683 = vmatpush1.msra.mxu0 %v541
    %684 = vmatprep.subr.mxu0 0.0
    %685 = vmatpush1.msra.mxu0 %v543
    %686 = vmatprep.subr.mxu0 0.0
    %687 = vmatpush1.msra.mxu0 %v545
    %688 = vmatprep.subr.mxu0 0.0
    %689 = vmatpush1.msra.mxu0 0.0
    %690 = vmatprep.subr.mxu0 0.0
    %691 = vmatpush1.msra.mxu0 0.0
    %692 = vmatprep.subr.mxu0 0.0
    %693 = vmatpush1.msra.mxu0 0.0
    %694 = vmatprep.subr.mxu0 0.0
    %695 = vmatpush1.msra.mxu0 0.0
    %696 = vmatprep.subr.mxu0 0.0
    %697 = vmatpush1.msra.mxu0 0.0
    %698 = vmatprep.subr.mxu0 0.0
    %699 = vmatpush1.msra.mxu0 0.0
    %700 = vmatprep.subr.mxu0 0.0
    %701 = vmatpush1.msra.mxu0 0.0
    %702 = vmatprep.subr.mxu0 0.0
    %703 = vmatpush1.msra.mxu0 0.0
    %704 = vmatprep.subr.mxu0 0.0
    %705 = vmatpush1.msra.mxu0 0.0
    %706 = vmatprep.subr.mxu0 0.0
    %707 = vmatpush1.msra.mxu0 0.0
    %708 = vmatprep.subr.mxu0 0.0
    %709 = vmatpush1.msra.mxu0 0.0
    %710 = vmatprep.subr.mxu0 0.0
    %711 = vmatpush1.msra.mxu0 0.0
    %712 = vmatprep.subr.mxu0 0.0
    %713 = vmatpush1.msra.mxu0 0.0
    %714 = vmatprep.subr.mxu0 0.0
    %715 = vmatpush1.msra.mxu0 0.0
    %716 = vmatprep.subr.mxu0 0.0
    %717 = vmatpush1.msra.mxu0 0.0
    %718 = vmatprep.subr.mxu0 0.0
    %719 = vmatpush1.msra.mxu0 0.0
    %720 = vmatprep.subr.mxu0 0.0
    %721 = vmatpush1.msra.mxu0 0.0
    %722 = vmatprep.subr.mxu0 0.0
    %723 = vmatpush1.msra.mxu0 0.0
    %724 = vmatprep.subr.mxu0 0.0
    %725 = vmatpush1.msra.mxu0 0.0
    %726 = vmatprep.subr.mxu0 0.0
    %727 = vmatpush1.msra.mxu0 0.0
    %728 = vmatprep.subr.mxu0 0.0
    %729 = vmatpush1.msra.mxu0 0.0
    %730 = vmatprep.subr.mxu0 0.0
    %731 = vmatpush1.msra.mxu0 0.0
    %732 = vmatprep.subr.mxu0 0.0
    %733 = vmatpush1.msra.mxu0 0.0
    %734 = vmatprep.subr.mxu0 0.0
    %735 = vmatpush1.msra.mxu0 0.0
    %736 = vmatprep.subr.mxu0 0.0
    %737 = vmatpush1.msra.mxu0 0.0
    %738 = vmatprep.subr.mxu0 0.0
    %739 = vmatpush1.msra.mxu0 0.0
    %740 = vmatprep.subr.mxu0 0.0
    %741 = vmatpush1.msra.mxu0 0.0
    %742 = vmatprep.subr.mxu0 0.0
    %743 = vmatpush1.msra.mxu0 0.0
    %744 = vmatprep.mubr.f32.mxu0 0.0
    %745 = vmatmul.mubr.f32.gmra.mrb[0].mxu0 %v669
    %v746 = vpop.f32.mrb[0].mxu0
    %v747 = vadd.f32 %v650, %v746
    %v748 = vpop.f32.mrb[0].mxu0
    %749 = vmatprep.mubr.f32.mxu0 0.0
    %750 = vmatmul.mubr.f32.gmra.mrb[0].mxu0 %v672
    %v751 = vpop.f32.mrb[0].mxu0
    %v752 = vadd.f32 %v655, %v751
    %v753 = vpop.f32.mrb[0].mxu0
    %754 = vmatprep.mubr.f32.mxu0 0.0
    %755 = vmatmul.mubr.f32.gmra.mrb[0].mxu0 %v675
    %v756 = vpop.f32.mrb[0].mxu0
    %v757 = vadd.f32 %v660, %v756
    %v758 = vpop.f32.mrb[0].mxu0
    %759 = vmatprep.mubr.f32.mxu0 0.0
    %760 = vmatmul.mubr.f32.gmra.mrb[0].mxu0 %v678
    %v761 = vpop.f32.mrb[0].mxu0
    %v762 = vadd.f32 %v665, %v761
    %v763 = vpop.f32.mrb[0].mxu0
    %764 = vdwg.mxu0
    %s765 = scalar_lea.vmem [#allocation2], 64
    %v766 = vld [vmem:[%s765] sm:$0xff]
    %v767 = vld [vmem:[%s765 + $0x8] sm:$0xff]
    %v768 = vld [vmem:[%s765 + $0x10] sm:$0xff]
    %v769 = vld [vmem:[%s765 + $0x18] sm:$0xff]
    %s770 = scalar_lea.vmem [#allocation2], 96
    %v771 = vld [vmem:[%s770] sm:$0xff]
    %v772 = vld [vmem:[%s770 + $0x8] sm:$0xff]
    %v773 = vld [vmem:[%s770 + $0x10] sm:$0xff]
    %v774 = vld [vmem:[%s770 + $0x18] sm:$0xff]
    %v776 = vsel %vm124, %v771, 0
    %v779 = vsel %vm124, %v772, 0
    %v782 = vsel %vm124, %v773, 0
    %v785 = vsel %vm124, %v774, 0
    %787 = vmatprep.subr.mxu0 0.0
    %788 = vmatpush1.msra.mxu0 %v560
    %789 = vmatprep.subr.mxu0 0.0
    %790 = vmatpush1.msra.mxu0 %v562
    %791 = vmatprep.subr.mxu0 0.0
    %792 = vmatpush1.msra.mxu0 %v564
    %793 = vmatprep.subr.mxu0 0.0
    %794 = vmatpush1.msra.mxu0 %v566
    %795 = vmatprep.subr.mxu0 0.0
    %796 = vmatpush1.msra.mxu0 0.0
    %797 = vmatprep.subr.mxu0 0.0
    %798 = vmatpush1.msra.mxu0 0.0
    %799 = vmatprep.subr.mxu0 0.0
    %800 = vmatpush1.msra.mxu0 0.0
    %801 = vmatprep.subr.mxu0 0.0
    %802 = vmatpush1.msra.mxu0 0.0
    %803 = vmatprep.subr.mxu0 0.0
    %804 = vmatpush1.msra.mxu0 0.0
    %805 = vmatprep.subr.mxu0 0.0
    %806 = vmatpush1.msra.mxu0 0.0
    %807 = vmatprep.subr.mxu0 0.0
    %808 = vmatpush1.msra.mxu0 0.0
    %809 = vmatprep.subr.mxu0 0.0
    %810 = vmatpush1.msra.mxu0 0.0
    %811 = vmatprep.subr.mxu0 0.0
    %812 = vmatpush1.msra.mxu0 0.0
    %813 = vmatprep.subr.mxu0 0.0
    %814 = vmatpush1.msra.mxu0 0.0
    %815 = vmatprep.subr.mxu0 0.0
    %816 = vmatpush1.msra.mxu0 0.0
    %817 = vmatprep.subr.mxu0 0.0
    %818 = vmatpush1.msra.mxu0 0.0
    %819 = vmatprep.subr.mxu0 0.0
    %820 = vmatpush1.msra.mxu0 0.0
    %821 = vmatprep.subr.mxu0 0.0
    %822 = vmatpush1.msra.mxu0 0.0
    %823 = vmatprep.subr.mxu0 0.0
    %824 = vmatpush1.msra.mxu0 0.0
    %825 = vmatprep.subr.mxu0 0.0
    %826 = vmatpush1.msra.mxu0 0.0
    %827 = vmatprep.subr.mxu0 0.0
    %828 = vmatpush1.msra.mxu0 0.0
    %829 = vmatprep.subr.mxu0 0.0
    %830 = vmatpush1.msra.mxu0 0.0
    %831 = vmatprep.subr.mxu0 0.0
    %832 = vmatpush1.msra.mxu0 0.0
    %833 = vmatprep.subr.mxu0 0.0
    %834 = vmatpush1.msra.mxu0 0.0
    %835 = vmatprep.subr.mxu0 0.0
    %836 = vmatpush1.msra.mxu0 0.0
    %837 = vmatprep.subr.mxu0 0.0
    %838 = vmatpush1.msra.mxu0 0.0
    %839 = vmatprep.subr.mxu0 0.0
    %840 = vmatpush1.msra.mxu0 0.0
    %841 = vmatprep.subr.mxu0 0.0
    %842 = vmatpush1.msra.mxu0 0.0
    %843 = vmatprep.subr.mxu0 0.0
    %844 = vmatpush1.msra.mxu0 0.0
    %845 = vmatprep.subr.mxu0 0.0
    %846 = vmatpush1.msra.mxu0 0.0
    %847 = vmatprep.subr.mxu0 0.0
    %848 = vmatpush1.msra.mxu0 0.0
    %849 = vmatprep.subr.mxu0 0.0
    %850 = vmatpush1.msra.mxu0 0.0
    %851 = vmatprep.mubr.f32.mxu0 0.0
    %852 = vmatmul.mubr.f32.gmra.mrb[0].mxu0 %v776
    %v853 = vpop.f32.mrb[0].mxu0
    %v854 = vadd.f32 0.0, %v853
    %v855 = vpop.f32.mrb[0].mxu0
    %856 = vmatprep.mubr.f32.mxu0 0.0
    %857 = vmatmul.mubr.f32.gmra.mrb[0].mxu0 %v779
    %v858 = vpop.f32.mrb[0].mxu0
    %v859 = vadd.f32 0.0, %v858
    %v860 = vpop.f32.mrb[0].mxu0
    %861 = vmatprep.mubr.f32.mxu0 0.0
    %862 = vmatmul.mubr.f32.gmra.mrb[0].mxu0 %v782
    %v863 = vpop.f32.mrb[0].mxu0
    %v864 = vadd.f32 0.0, %v863
    %v865 = vpop.f32.mrb[0].mxu0
    %866 = vmatprep.mubr.f32.mxu0 0.0
    %867 = vmatmul.mubr.f32.gmra.mrb[0].mxu0 %v785
    %v868 = vpop.f32.mrb[0].mxu0
    %v869 = vadd.f32 0.0, %v868
    %v870 = vpop.f32.mrb[0].mxu0
    %871 = vdwg.mxu0
    %v873 = vsel %vm124, %v766, 0
    %v876 = vsel %vm124, %v767, 0
    %v879 = vsel %vm124, %v768, 0
    %v882 = vsel %vm124, %v769, 0
    %884 = vmatprep.subr.mxu0 0.0
    %885 = vmatpush1.msra.mxu0 %v539
    %886 = vmatprep.subr.mxu0 0.0
    %887 = vmatpush1.msra.mxu0 %v541
    %888 = vmatprep.subr.mxu0 0.0
    %889 = vmatpush1.msra.mxu0 %v543
    %890 = vmatprep.subr.mxu0 0.0
    %891 = vmatpush1.msra.mxu0 %v545
    %892 = vmatprep.subr.mxu0 0.0
    %893 = vmatpush1.msra.mxu0 0.0
    %894 = vmatprep.subr.mxu0 0.0
    %895 = vmatpush1.msra.mxu0 0.0
    %896 = vmatprep.subr.mxu0 0.0
    %897 = vmatpush1.msra.mxu0 0.0
    %898 = vmatprep.subr.mxu0 0.0
    %899 = vmatpush1.msra.mxu0 0.0
    %900 = vmatprep.subr.mxu0 0.0
    %901 = vmatpush1.msra.mxu0 0.0
    %902 = vmatprep.subr.mxu0 0.0
    %903 = vmatpush1.msra.mxu0 0.0
    %904 = vmatprep.subr.mxu0 0.0
    %905 = vmatpush1.msra.mxu0 0.0
    %906 = vmatprep.subr.mxu0 0.0
    %907 = vmatpush1.msra.mxu0 0.0
    %908 = vmatprep.subr.mxu0 0.0
    %909 = vmatpush1.msra.mxu0 0.0
    %910 = vmatprep.subr.mxu0 0.0
    %911 = vmatpush1.msra.mxu0 0.0
    %912 = vmatprep.subr.mxu0 0.0
    %913 = vmatpush1.msra.mxu0 0.0
    %914 = vmatprep.subr.mxu0 0.0
    %915 = vmatpush1.msra.mxu0 0.0
    %916 = vmatprep.subr.mxu0 0.0
    %917 = vmatpush1.msra.mxu0 0.0
    %918 = vmatprep.subr.mxu0 0.0
    %919 = vmatpush1.msra.mxu0 0.0
    %920 = vmatprep.subr.mxu0 0.0
    %921 = vmatpush1.msra.mxu0 0.0
    %922 = vmatprep.subr.mxu0 0.0
    %923 = vmatpush1.msra.mxu0 0.0
    %924 = vmatprep.subr.mxu0 0.0
    %925 = vmatpush1.msra.mxu0 0.0
    %926 = vmatprep.subr.mxu0 0.0
    %927 = vmatpush1.msra.mxu0 0.0
    %928 = vmatprep.subr.mxu0 0.0
    %929 = vmatpush1.msra.mxu0 0.0
    %930 = vmatprep.subr.mxu0 0.0
    %931 = vmatpush1.msra.mxu0 0.0
    %932 = vmatprep.subr.mxu0 0.0
    %933 = vmatpush1.msra.mxu0 0.0
    %934 = vmatprep.subr.mxu0 0.0
    %935 = vmatpush1.msra.mxu0 0.0
    %936 = vmatprep.subr.mxu0 0.0
    %937 = vmatpush1.msra.mxu0 0.0
    %938 = vmatprep.subr.mxu0 0.0
    %939 = vmatpush1.msra.mxu0 0.0
    %940 = vmatprep.subr.mxu0 0.0
    %941 = vmatpush1.msra.mxu0 0.0
    %942 = vmatprep.subr.mxu0 0.0
    %943 = vmatpush1.msra.mxu0 0.0
    %944 = vmatprep.subr.mxu0 0.0
    %945 = vmatpush1.msra.mxu0 0.0
    %946 = vmatprep.subr.mxu0 0.0
    %947 = vmatpush1.msra.mxu0 0.0
    %948 = vmatprep.mubr.f32.mxu0 0.0
    %949 = vmatmul.mubr.f32.gmra.mrb[0].mxu0 %v873
    %v950 = vpop.f32.mrb[0].mxu0
    %v951 = vadd.f32 %v854, %v950
    %v952 = vpop.f32.mrb[0].mxu0
    %953 = vmatprep.mubr.f32.mxu0 0.0
    %954 = vmatmul.mubr.f32.gmra.mrb[0].mxu0 %v876
    %v955 = vpop.f32.mrb[0].mxu0
    %v956 = vadd.f32 %v859, %v955
    %v957 = vpop.f32.mrb[0].mxu0
    %958 = vmatprep.mubr.f32.mxu0 0.0
    %959 = vmatmul.mubr.f32.gmra.mrb[0].mxu0 %v879
    %v960 = vpop.f32.mrb[0].mxu0
    %v961 = vadd.f32 %v864, %v960
    %v962 = vpop.f32.mrb[0].mxu0
    %963 = vmatprep.mubr.f32.mxu0 0.0
    %964 = vmatmul.mubr.f32.gmra.mrb[0].mxu0 %v882
    %v965 = vpop.f32.mrb[0].mxu0
    %v966 = vadd.f32 %v869, %v965
    %v967 = vpop.f32.mrb[0].mxu0
    %968 = vdwg.mxu0
    %v969 = vmul.f32 %v747, %v116
    %v970 = vmul.f32 %v752, %v117
    %v971 = vmul.f32 %v757, %v118
    %v972 = vmul.f32 %v762, %v119
    %973 = vmatprep.subr.mxu0 0.0
    %974 = vmatpush1.msra.mxu0 %v969
    %975 = vmatprep.subr.mxu0 0.0
    %976 = vmatpush1.msra.mxu0 %v970
    %977 = vmatprep.subr.mxu0 0.0
    %978 = vmatpush1.msra.mxu0 %v971
    %979 = vmatprep.subr.mxu0 0.0
    %980 = vmatpush1.msra.mxu0 %v972
    %981 = vmatprep.subr.mxu0 0.0
    %982 = vmatpush1.msra.mxu0 0.0
    %983 = vmatprep.subr.mxu0 0.0
    %984 = vmatpush1.msra.mxu0 0.0
    %985 = vmatprep.subr.mxu0 0.0
    %986 = vmatpush1.msra.mxu0 0.0
    %987 = vmatprep.subr.mxu0 0.0
    %988 = vmatpush1.msra.mxu0 0.0
    %989 = vmatprep.subr.mxu0 0.0
    %990 = vmatpush1.msra.mxu0 0.0
    %991 = vmatprep.subr.mxu0 0.0
    %992 = vmatpush1.msra.mxu0 0.0
    %993 = vmatprep.subr.mxu0 0.0
    %994 = vmatpush1.msra.mxu0 0.0
    %995 = vmatprep.subr.mxu0 0.0
    %996 = vmatpush1.msra.mxu0 0.0
    %997 = vmatprep.subr.mxu0 0.0
    %998 = vmatpush1.msra.mxu0 0.0
    %999 = vmatprep.subr.mxu0 0.0
    %1000 = vmatpush1.msra.mxu0 0.0
    %1001 = vmatprep.subr.mxu0 0.0
    %1002 = vmatpush1.msra.mxu0 0.0
    %1003 = vmatprep.subr.mxu0 0.0
    %1004 = vmatpush1.msra.mxu0 0.0
    %1005 = vmatprep.subr.mxu0 0.0
    %1006 = vmatpush1.msra.mxu0 0.0
    %1007 = vmatprep.subr.mxu0 0.0
    %1008 = vmatpush1.msra.mxu0 0.0
    %1009 = vmatprep.subr.mxu0 0.0
    %1010 = vmatpush1.msra.mxu0 0.0
    %1011 = vmatprep.subr.mxu0 0.0
    %1012 = vmatpush1.msra.mxu0 0.0
    %1013 = vmatprep.subr.mxu0 0.0
    %1014 = vmatpush1.msra.mxu0 0.0
    %1015 = vmatprep.subr.mxu0 0.0
    %1016 = vmatpush1.msra.mxu0 0.0
    %1017 = vmatprep.subr.mxu0 0.0
    %1018 = vmatpush1.msra.mxu0 0.0
    %1019 = vmatprep.subr.mxu0 0.0
    %1020 = vmatpush1.msra.mxu0 0.0
    %1021 = vmatprep.subr.mxu0 0.0
    %1022 = vmatpush1.msra.mxu0 0.0
    %1023 = vmatprep.subr.mxu0 0.0
    %1024 = vmatpush1.msra.mxu0 0.0
    %1025 = vmatprep.subr.mxu0 0.0
    %1026 = vmatpush1.msra.mxu0 0.0
    %1027 = vmatprep.subr.mxu0 0.0
    %1028 = vmatpush1.msra.mxu0 0.0
    %1029 = vmatprep.subr.mxu0 0.0
    %1030 = vmatpush1.msra.mxu0 0.0
    %1031 = vmatprep.subr.mxu0 0.0
    %1032 = vmatpush1.msra.mxu0 0.0
    %1033 = vmatprep.subr.mxu0 0.0
    %1034 = vmatpush1.msra.mxu0 0.0
    %1035 = vmatprep.subr.mxu0 0.0
    %1036 = vmatpush1.msra.mxu0 0.0
    %1037 = vmatprep.mubr.f32.mxu0 0.0
    %1038 = vmatmul.mubr.f32.gmra.mrb[0].mxu0 %v126
    %v1039 = vpop.f32.mrb[0].mxu0
    %v1040 = vadd.f32 0.0, %v1039
    %v1041 = vpop.f32.mrb[0].mxu0
    %1042 = vmatprep.mubr.f32.mxu0 0.0
    %1043 = vmatmul.mubr.f32.gmra.mrb[0].mxu0 %v129
    %v1044 = vpop.f32.mrb[0].mxu0
    %v1045 = vadd.f32 0.0, %v1044
    %v1046 = vpop.f32.mrb[0].mxu0
    %1047 = vmatprep.mubr.f32.mxu0 0.0
    %1048 = vmatmul.mubr.f32.gmra.mrb[0].mxu0 %v132
    %v1049 = vpop.f32.mrb[0].mxu0
    %v1050 = vadd.f32 0.0, %v1049
    %v1051 = vpop.f32.mrb[0].mxu0
    %1052 = vmatprep.mubr.f32.mxu0 0.0
    %1053 = vmatmul.mubr.f32.gmra.mrb[0].mxu0 %v135
    %v1054 = vpop.f32.mrb[0].mxu0
    %v1055 = vadd.f32 0.0, %v1054
    %v1056 = vpop.f32.mrb[0].mxu0
    %1057 = vdwg.mxu0
    %v1058 = vld [vmem:[#allocation11] sm:$0x3]
    %v1059 = vld [vmem:[%s8] sm:$0xff]
    %v1060 = vld [vmem:[%s8 + $0x8] sm:$0xff]
    %v1061 = vld [vmem:[%s8 + $0x10] sm:$0xff]
    %v1062 = vld [vmem:[%s8 + $0x18] sm:$0xff]
    %v1064 = vsel %vm124, %v1040, 0
    %v1067 = vsel %vm124, %v1045, 0
    %v1070 = vsel %vm124, %v1050, 0
    %v1073 = vsel %vm124, %v1055, 0
    %1075 = vmatprep.subr.mxu0 0.0
    %1076 = vmatpush1.msra.mxu0 %v1059
    %1077 = vmatprep.subr.mxu0 0.0
    %1078 = vmatpush1.msra.mxu0 %v1060
    %1079 = vmatprep.subr.mxu0 0.0
    %1080 = vmatpush1.msra.mxu0 %v1061
    %1081 = vmatprep.subr.mxu0 0.0
    %1082 = vmatpush1.msra.mxu0 %v1062
    %1083 = vmatprep.subr.mxu0 0.0
    %1084 = vmatpush1.msra.mxu0 0.0
    %1085 = vmatprep.subr.mxu0 0.0
    %1086 = vmatpush1.msra.mxu0 0.0
    %1087 = vmatprep.subr.mxu0 0.0
    %1088 = vmatpush1.msra.mxu0 0.0
    %1089 = vmatprep.subr.mxu0 0.0
    %1090 = vmatpush1.msra.mxu0 0.0
    %1091 = vmatprep.subr.mxu0 0.0
    %1092 = vmatpush1.msra.mxu0 0.0
    %1093 = vmatprep.subr.mxu0 0.0
    %1094 = vmatpush1.msra.mxu0 0.0
    %1095 = vmatprep.subr.mxu0 0.0
    %1096 = vmatpush1.msra.mxu0 0.0
    %1097 = vmatprep.subr.mxu0 0.0
    %1098 = vmatpush1.msra.mxu0 0.0
    %1099 = vmatprep.subr.mxu0 0.0
    %1100 = vmatpush1.msra.mxu0 0.0
    %1101 = vmatprep.subr.mxu0 0.0
    %1102 = vmatpush1.msra.mxu0 0.0
    %1103 = vmatprep.subr.mxu0 0.0
    %1104 = vmatpush1.msra.mxu0 0.0
    %1105 = vmatprep.subr.mxu0 0.0
    %1106 = vmatpush1.msra.mxu0 0.0
    %1107 = vmatprep.subr.mxu0 0.0
    %1108 = vmatpush1.msra.mxu0 0.0
    %1109 = vmatprep.subr.mxu0 0.0
    %1110 = vmatpush1.msra.mxu0 0.0
    %1111 = vmatprep.subr.mxu0 0.0
    %1112 = vmatpush1.msra.mxu0 0.0
    %1113 = vmatprep.subr.mxu0 0.0
    %1114 = vmatpush1.msra.mxu0 0.0
    %1115 = vmatprep.subr.mxu0 0.0
    %1116 = vmatpush1.msra.mxu0 0.0
    %1117 = vmatprep.subr.mxu0 0.0
    %1118 = vmatpush1.msra.mxu0 0.0
    %1119 = vmatprep.subr.mxu0 0.0
    %1120 = vmatpush1.msra.mxu0 0.0
    %1121 = vmatprep.subr.mxu0 0.0
    %1122 = vmatpush1.msra.mxu0 0.0
    %1123 = vmatprep.subr.mxu0 0.0
    %1124 = vmatpush1.msra.mxu0 0.0
    %1125 = vmatprep.subr.mxu0 0.0
    %1126 = vmatpush1.msra.mxu0 0.0
    %1127 = vmatprep.subr.mxu0 0.0
    %1128 = vmatpush1.msra.mxu0 0.0
    %1129 = vmatprep.subr.mxu0 0.0
    %1130 = vmatpush1.msra.mxu0 0.0
    %1131 = vmatprep.subr.mxu0 0.0
    %1132 = vmatpush1.msra.mxu0 0.0
    %1133 = vmatprep.subr.mxu0 0.0
    %1134 = vmatpush1.msra.mxu0 0.0
    %1135 = vmatprep.subr.mxu0 0.0
    %1136 = vmatpush1.msra.mxu0 0.0
    %1137 = vmatprep.subr.mxu0 0.0
    %1138 = vmatpush1.msra.mxu0 0.0
    %1139 = vmatprep.mubr.f32.mxu0 0.0
    %1140 = vmatmul.mubr.f32.gmra.mrb[0].mxu0 %v1064
    %v1141 = vpop.f32.mrb[0].mxu0
    %v1142 = vadd.f32 0.0, %v1141
    %v1143 = vpop.f32.mrb[0].mxu0
    %1144 = vmatprep.mubr.f32.mxu0 0.0
    %1145 = vmatmul.mubr.f32.gmra.mrb[0].mxu0 %v1067
    %v1146 = vpop.f32.mrb[0].mxu0
    %v1147 = vadd.f32 0.0, %v1146
    %v1148 = vpop.f32.mrb[0].mxu0
    %1149 = vmatprep.mubr.f32.mxu0 0.0
    %1150 = vmatmul.mubr.f32.gmra.mrb[0].mxu0 %v1070
    %v1151 = vpop.f32.mrb[0].mxu0
    %v1152 = vadd.f32 0.0, %v1151
    %v1153 = vpop.f32.mrb[0].mxu0
    %1154 = vmatprep.mubr.f32.mxu0 0.0
    %1155 = vmatmul.mubr.f32.gmra.mrb[0].mxu0 %v1073
    %v1156 = vpop.f32.mrb[0].mxu0
    %v1157 = vadd.f32 0.0, %v1156
    %v1158 = vpop.f32.mrb[0].mxu0
    %1159 = vdwg.mxu0
    %v1161 = vsel %vm422, %v1058, 0
    %1163 = vmatprep.subr.mxu0 0.0
    %1164 = vmatpush1.msra.mxu0 %v1161
    %1165 = vmatprep.subr.mxu0 0.0
    %1166 = vmatpush1.msra.mxu0 0.0
    %1167 = vmatprep.subr.mxu0 0.0
    %1168 = vmatpush1.msra.mxu0 0.0
    %1169 = vmatprep.subr.mxu0 0.0
    %1170 = vmatpush1.msra.mxu0 0.0
    %1171 = vmatprep.subr.mxu0 0.0
    %1172 = vmatpush1.msra.mxu0 0.0
    %1173 = vmatprep.subr.mxu0 0.0
    %1174 = vmatpush1.msra.mxu0 0.0
    %1175 = vmatprep.subr.mxu0 0.0
    %1176 = vmatpush1.msra.mxu0 0.0
    %1177 = vmatprep.subr.mxu0 0.0
    %1178 = vmatpush1.msra.mxu0 0.0
    %1179 = vmatprep.subr.mxu0 0.0
    %1180 = vmatpush1.msra.mxu0 0.0
    %1181 = vmatprep.subr.mxu0 0.0
    %1182 = vmatpush1.msra.mxu0 0.0
    %1183 = vmatprep.subr.mxu0 0.0
    %1184 = vmatpush1.msra.mxu0 0.0
    %1185 = vmatprep.subr.mxu0 0.0
    %1186 = vmatpush1.msra.mxu0 0.0
    %1187 = vmatprep.subr.mxu0 0.0
    %1188 = vmatpush1.msra.mxu0 0.0
    %1189 = vmatprep.subr.mxu0 0.0
    %1190 = vmatpush1.msra.mxu0 0.0
    %1191 = vmatprep.subr.mxu0 0.0
    %1192 = vmatpush1.msra.mxu0 0.0
    %1193 = vmatprep.subr.mxu0 0.0
    %1194 = vmatpush1.msra.mxu0 0.0
    %1195 = vmatprep.subr.mxu0 0.0
    %1196 = vmatpush1.msra.mxu0 0.0
    %1197 = vmatprep.subr.mxu0 0.0
    %1198 = vmatpush1.msra.mxu0 0.0
    %1199 = vmatprep.subr.mxu0 0.0
    %1200 = vmatpush1.msra.mxu0 0.0
    %1201 = vmatprep.subr.mxu0 0.0
    %1202 = vmatpush1.msra.mxu0 0.0
    %1203 = vmatprep.subr.mxu0 0.0
    %1204 = vmatpush1.msra.mxu0 0.0
    %1205 = vmatprep.subr.mxu0 0.0
    %1206 = vmatpush1.msra.mxu0 0.0
    %1207 = vmatprep.subr.mxu0 0.0
    %1208 = vmatpush1.msra.mxu0 0.0
    %1209 = vmatprep.subr.mxu0 0.0
    %1210 = vmatpush1.msra.mxu0 0.0
    %1211 = vmatprep.subr.mxu0 0.0
    %1212 = vmatpush1.msra.mxu0 0.0
    %1213 = vmatprep.subr.mxu0 0.0
    %1214 = vmatpush1.msra.mxu0 0.0
    %1215 = vmatprep.subr.mxu0 0.0
    %1216 = vmatpush1.msra.mxu0 0.0
    %1217 = vmatprep.subr.mxu0 0.0
    %1218 = vmatpush1.msra.mxu0 0.0
    %1219 = vmatprep.subr.mxu0 0.0
    %1220 = vmatpush1.msra.mxu0 0.0
    %1221 = vmatprep.subr.mxu0 0.0
    %1222 = vmatpush1.msra.mxu0 0.0
    %1223 = vmatprep.subr.mxu0 0.0
    %1224 = vmatpush1.msra.mxu0 0.0
    %1225 = vmatprep.subr.mxu0 0.0
    %1226 = vmatpush1.msra.mxu0 0.0
    %1227 = vmatprep.mubr.f32.mxu0 0.0
    %1228 = vmatmul.mubr.f32.gmra.mrb[0].mxu0 %v411
    %v1229 = vpop.f32.mrb[0].mxu0
    %v1230 = vadd.f32 %v1142, %v1229
    %v1231 = vpop.f32.mrb[0].mxu0
    %1232 = vmatprep.mubr.f32.mxu0 0.0
    %1233 = vmatmul.mubr.f32.gmra.mrb[0].mxu0 %v414
    %v1234 = vpop.f32.mrb[0].mxu0
    %v1235 = vadd.f32 %v1147, %v1234
    %v1236 = vpop.f32.mrb[0].mxu0
    %1237 = vmatprep.mubr.f32.mxu0 0.0
    %1238 = vmatmul.mubr.f32.gmra.mrb[0].mxu0 %v417
    %v1239 = vpop.f32.mrb[0].mxu0
    %v1240 = vadd.f32 %v1152, %v1239
    %v1241 = vpop.f32.mrb[0].mxu0
    %1242 = vmatprep.mubr.f32.mxu0 0.0
    %1243 = vmatmul.mubr.f32.gmra.mrb[0].mxu0 %v420
    %v1244 = vpop.f32.mrb[0].mxu0
    %v1245 = vadd.f32 %v1157, %v1244
    %v1246 = vpop.f32.mrb[0].mxu0
    %1247 = vdwg.mxu0
    %v1248 = vld [vmem:[%s9] sm:$0x1]
    %v1250 = vlaneseq
    %v1251 = vshrl.u32 %v1250, 7
    %v1252 = vsub.s32 0, %v1251
    %v1253 = vrot.slane %v1248, %v1252
    %v1255 = vadd.f32 %v1230, %v1253
    %v1256 = vadd.f32 %v1235, %v1253
    %v1257 = vadd.f32 %v1240, %v1253
    %v1258 = vadd.f32 %v1245, %v1253
    %v1259 = vtanh.pop %v1255
    %v1260 = vtanh.pop %v1256
    %v1261 = vtanh.pop %v1257
    %v1262 = vtanh.pop %v1258
    %v1263 = vmul.f32 %v951, %v116
    %v1264 = vmul.f32 %v956, %v117
    %v1265 = vmul.f32 %v961, %v118
    %v1266 = vmul.f32 %v966, %v119
    %v1267 = vsub.f32 1.0, %v951
    %v1268 = vsub.f32 1.0, %v956
    %v1269 = vsub.f32 1.0, %v961
    %v1270 = vsub.f32 1.0, %v966
    %v1271 = vmul.f32 %v1267, %v1259
    %v1272 = vmul.f32 %v1268, %v1260
    %v1273 = vmul.f32 %v1269, %v1261
    %v1274 = vmul.f32 %v1270, %v1262
    %v1275 = vadd.f32 %v1263, %v1271
    %v1276 = vadd.f32 %v1264, %v1272
    %v1277 = vadd.f32 %v1265, %v1273
    %v1278 = vadd.f32 %v1266, %v1274
    %1279 = vst.msk [vmem:[#allocation13] sm:$0xff] %vm124, %v1275
    %1280 = vst.msk [vmem:[#allocation13 + $0x8] sm:$0xff] %vm124, %v1276
    %1281 = vst.msk [vmem:[#allocation13 + $0x10] sm:$0xff] %vm124, %v1277
    %1282 = vst.msk [vmem:[#allocation13 + $0x18] sm:$0xff] %vm124, %v1278
    // Predicated region
    $region66: #{tpu_custom_call.1} parent=1 // pred_check
      _
    $region67: #{tpu_custom_call.1} parent=1 // pred_check_branch
      %1284 = sbr.rel (0) target = $region69
    $region68: #{tpu_custom_call.1} parent=1 // pred_region
      %s1286 = ssub.s32 512, 512
      %1287 = vsyncadd [#allocation4], %s1286
      %s1288 = sshll.u32 [#allocation13], 4
      %s1289 = int_to_ptr.vmem [resolvable:$true] %s1288
      %1294 = dma.vmem_to_hbm [thread:$0]  %s1289, 512, %s10, [#allocation4], 128, 128, 8
    $region69: #{tpu_custom_call.1} parent=1 // pred_fallthru
      _
    // Predicated region
    $region70: #{tpu_custom_call.1} parent=1 // pred_check
      _
    $region71: #{tpu_custom_call.1} parent=1 // pred_check_branch
      %1296 = sbr.rel (0) target = $region73
    $region72: #{tpu_custom_call.1} parent=1 // pred_region
      %1297 = dma.done [#allocation4], 512
    $region73: #{tpu_custom_call.1} parent=1 // pred_fallthru
      _
    %1298 = vsyncpa [#allocation3], 1
    %1299 = vsyncpa [#allocation6], 1
    %1300 = vsyncpa [#allocation9], 1
    %1301 = vsyncpa [#allocation12], 1
    %1302 = vsyncpa [#allocation4], 1

</llo_original>
